<compile_context>
chip_gen: v7x
topology: tpu7x:2x2x1
jax: 0.10.0
libtpu: 0.0.40
codegen_flags: <defaults>
</compile_context>

<pallas_src>
import functools

import jax
import jax.numpy as jnp
from jax.experimental import pallas as pl
from jax.experimental.pallas import tpu as pltpu

LANE = 128             # lane width of a vreg
SUB = 8                # f32 sublane count of a vreg
MAX_BLOCK_ROWS = 4096  # 4096*128*4 B = 2 MiB per f32 block; in+out double-buffered ~8 MiB


def _round_up(a, b):
    return (a + b - 1) // b * b


def _num_tensorcores():
    """Best-effort detection of TensorCores per chip (v7x has 2, v5e/v6e have 1)."""
    try:
        dev = jax.devices()[0]
        if dev.platform != "tpu":
            return 1
        kind = (getattr(dev, "device_kind", "") or "").lower()
        if "v7" in kind:
            return 2
    except Exception:
        pass
    return 1


def _qhardswish_kernel(x_ref, o_ref, *, requant_mul, scale, lo, hi, qmin, qmax,
                       skip_low_clip):
    # Cast after load: input DMA stays at the source dtype's width.
    x = x_ref[...].astype(jnp.float32)

    # quantize_per_tensor(x, scale=1.0, zero_point=0, dtype)
    # jnp.round is round-half-to-even, matching PyTorch's nearbyint rounding.
    q1 = jnp.clip(jnp.round(x), qmin, qmax)          # dequant == q1 (scale=1, zp=0)

    # hardswish gate: for quint8 q1 >= 0 so q1+3 >= 3, lower clip is redundant.
    if skip_low_clip:
        gate = jnp.minimum(q1 + 3.0, 6.0)
    else:
        gate = jnp.clip(q1 + 3.0, 0.0, 6.0)
    t = q1 * gate                                    # == 6 * hardswish(q1)

    # requantize: divide-by-6 and divide-by-scale folded into one multiply;
    # zero_point folded into the clip bounds (exact, constants baked at trace time).
    q2m = jnp.clip(jnp.round(t * requant_mul), lo, hi)   # == q2 - zero_point

    # dequantize: (q2 - zp) * scale
    o_ref[...] = (q2m * scale).astype(o_ref.dtype)


def _pick_block_rows(rows, sub, num_tc):
    """Biggest aligned block that fits the VMEM budget; on multi-TC chips keep
    >= 2 blocks per core so BlockSpec double-buffering overlaps DMA with compute."""
    aligned = _round_up(rows, sub)
    if num_tc <= 1:
        # Single TensorCore: splitting is pure per-step overhead.
        return min(MAX_BLOCK_ROWS, aligned)
    min_blocks = 2 * num_tc
    per_block = _round_up(pl.cdiv(rows, min_blocks), sub)
    return max(sub, min(MAX_BLOCK_ROWS, per_block, aligned))


def quantized_hardswish(x, scale, zero_point, dtype="quint8"):
    """JAX/Pallas equivalent of the PyTorch quantized_hardswish forward."""
    if dtype == "quint8":
        qmin, qmax = 0.0, 255.0
    elif dtype == "qint8":
        qmin, qmax = -128.0, 127.0
    else:
        raise ValueError(f"unsupported quantized dtype: {dtype}")

    orig_shape = x.shape
    if x.dtype not in (jnp.float32, jnp.bfloat16, jnp.float16):
        x = x.astype(jnp.float32)
    n = x.size

    # Sublane alignment for the source dtype (f32: 8, bf16/f16: 16).
    itemsize = jnp.dtype(x.dtype).itemsize
    sub = SUB * max(1, 4 // itemsize)

    s = float(scale)
    zp = float(zero_point)
    requant_mul = 1.0 / (6.0 * s)
    lo, hi = qmin - zp, qmax - zp

    kernel = functools.partial(
        _qhardswish_kernel,
        requant_mul=requant_mul,
        scale=s,
        lo=lo,
        hi=hi,
        qmin=qmin,
        qmax=qmax,
        skip_low_clip=(qmin >= -3.0),
    )
    num_tc = _num_tensorcores()

    def run(x2d):
        rows = x2d.shape[0]
        block_rows = _pick_block_rows(rows, sub, num_tc)
        grid = (pl.cdiv(rows, block_rows),)   # ceil-div: partial trailing block is masked
        return pl.pallas_call(
            kernel,
            out_shape=jax.ShapeDtypeStruct((rows, LANE), jnp.float32),
            grid=grid,
            in_specs=[pl.BlockSpec((block_rows, LANE), lambda i: (i, 0))],
            out_specs=pl.BlockSpec((block_rows, LANE), lambda i: (i, 0)),
            compiler_params=pltpu.CompilerParams(
                dimension_semantics=("parallel",)),
        )(x2d)

    n_main = (n // LANE) * LANE
    if n_main == n:
        # Lane-aligned: no padding copy, contiguous reshape is free; ragged row
        # count (rows % 8 != 0) is handled by Pallas' partial-block masking.
        out2d = run(x.reshape(n // LANE, LANE))
        return out2d.reshape(orig_shape)

    # Ragged last chunk (< 128 elements): kernel handles the aligned prefix,
    # a tiny pure-jnp epilogue handles the tail (avoids full-tensor pad + slice).
    flat = x.reshape(-1)
    parts = []
    if n_main > 0:
        parts.append(run(flat[:n_main].reshape(n_main // LANE, LANE)).reshape(-1))
    tail = flat[n_main:].astype(jnp.float32)
    q1 = jnp.clip(jnp.round(tail), qmin, qmax)
    t = q1 * jnp.clip(q1 + 3.0, 0.0, 6.0)
    q2m = jnp.clip(jnp.round(t * requant_mul), lo, hi)
    parts.append(q2m * s)
    return jnp.concatenate(parts).reshape(orig_shape)


def _reference(x, scale, zero_point, dtype="quint8"):
    """Pure-JAX reference mirroring the PyTorch quant->hardswish->requant->dequant chain."""
    qmin, qmax = (0.0, 255.0) if dtype == "quint8" else (-128.0, 127.0)
    x = x.astype(jnp.float32)
    q1 = jnp.clip(jnp.round(x), qmin, qmax)
    hs = q1 * jnp.clip(q1 + 3.0, 0.0, 6.0) / 6.0
    q2 = jnp.clip(jnp.round(hs / scale) + zero_point, qmin, qmax)
    return (q2 - zero_point) * scale


if __name__ == "__main__":
    key = jax.random.PRNGKey(0)
    # NCHW input, small shape consistent with the layer test.
    x = jax.random.uniform(key, (2, 4, 16, 16), dtype=jnp.float32,
                           minval=-6.0, maxval=6.0)

    scale = 0.3
    zero_point = 1
    qdtype = "quint8"

    out = quantized_hardswish(x, scale, zero_point, qdtype)
    out = jax.block_until_ready(out)

    ref = _reference(x, scale, zero_point, qdtype)
    assert out.shape == x.shape and out.dtype == jnp.float32
    assert jnp.allclose(out, ref, atol=1e-5), "mismatch vs reference"

    print("KERNEL_OK")
</pallas_src>

<mosaic_0001>
module attributes {stable_mosaic.version = 11 : i64} {
  func.func @_qhardswish_kernel(%arg0: i32, %arg1: memref<16x128xf32, #tpu.memory_space<vmem>>, %arg2: memref<16x128xf32, #tpu.memory_space<vmem>>) attributes {dimension_semantics = [#tpu.dimension_semantics<parallel>], iteration_bounds = array<i64: 1>, scalar_prefetch = 0 : i64, scratch_operands = 0 : i64, tpu.core_type = #tpu.core_type<tc>, window_params = [{transform_indices = @transform_0, window_bounds = array<i64: 16, 128>}, {transform_indices = @transform_1, window_bounds = array<i64: 16, 128>}]} {
    %c0 = arith.constant 0 : index
    %c0_0 = arith.constant 0 : index
    %0 = vector.load %arg1[%c0, %c0_0] : memref<16x128xf32, #tpu.memory_space<vmem>>, vector<16x128xf32>
    %1 = math.roundeven %0 : vector<16x128xf32>
    %cst = arith.constant 0.000000e+00 : f32
    %cst_1 = arith.constant 2.550000e+02 : f32
    %2 = vector.broadcast %cst : f32 to vector<16x128xf32>
    %3 = arith.maximumf %2, %1 : vector<16x128xf32>
    %4 = vector.broadcast %cst_1 : f32 to vector<16x128xf32>
    %5 = arith.minimumf %4, %3 : vector<16x128xf32>
    %cst_2 = arith.constant 3.000000e+00 : f32
    %6 = vector.broadcast %cst_2 : f32 to vector<16x128xf32>
    %7 = arith.addf %5, %6 : vector<16x128xf32>
    %cst_3 = arith.constant 6.000000e+00 : f32
    %8 = vector.broadcast %cst_3 : f32 to vector<16x128xf32>
    %9 = arith.minimumf %7, %8 : vector<16x128xf32>
    %10 = arith.mulf %5, %9 : vector<16x128xf32>
    %cst_4 = arith.constant 0.555555582 : f32
    %11 = vector.broadcast %cst_4 : f32 to vector<16x128xf32>
    %12 = arith.mulf %10, %11 : vector<16x128xf32>
    %13 = math.roundeven %12 : vector<16x128xf32>
    %cst_5 = arith.constant -1.000000e+00 : f32
    %cst_6 = arith.constant 2.540000e+02 : f32
    %14 = vector.broadcast %cst_5 : f32 to vector<16x128xf32>
    %15 = arith.maximumf %14, %13 : vector<16x128xf32>
    %16 = vector.broadcast %cst_6 : f32 to vector<16x128xf32>
    %17 = arith.minimumf %16, %15 : vector<16x128xf32>
    %cst_7 = arith.constant 3.000000e-01 : f32
    %18 = vector.broadcast %cst_7 : f32 to vector<16x128xf32>
    %19 = arith.mulf %17, %18 : vector<16x128xf32>
    %c0_8 = arith.constant 0 : index
    %c0_9 = arith.constant 0 : index
    %20 = vector.load %arg2[%c0_8, %c0_9] : memref<16x128xf32, #tpu.memory_space<vmem>>, vector<16x128xf32>
    tpu.vector_store %arg2[%c0_8, %c0_9], %19 {strides = array<i32>} : memref<16x128xf32, #tpu.memory_space<vmem>>, vector<16x128xf32>,
    return
  }
  func.func @transform_0(%arg0: i32) -> (i32, i32) {
    %c0_i32 = arith.constant 0 : i32
    %c0_i32_0 = arith.constant 0 : i32
    return %arg0, %c0_i32 : i32, i32
  }
  func.func @transform_1(%arg0: i32) -> (i32, i32) {
    %c0_i32 = arith.constant 0 : i32
    %c0_i32_0 = arith.constant 0 : i32
    return %arg0, %c0_i32 : i32, i32
  }
}

</mosaic_0001>

<llo_original>
// kernel: tpu_custom_call.1
$region0: #{tpu_custom_call.1}
  #allocation0 [shape = 'u32[]', space=smem, size = 0x4, offset = 0x4, fixed_abs, tag = 'smem constant byte address 0x4 - core index']
  #allocation1 [shape = 'u32[144,128]{1,0:T(1,128)}', space=vmem, size = 0x12000, scoped, tag = 'internal scratch']
  %s0 = inlined_call_operand.hbm [shape: f32[16,128], index: 0, kind: input, shape index: {}]
  %s1 = inlined_call_operand.hbm [shape: f32[16,128], index: 1, kind: output, shape index: {}]
  %s2 = sld [smem:[#allocation0]]
  $region18: #{tpu_custom_call.1} parent=0
    _
  %s4 = ssub.s32 1, %s2
  %s5 = scalar_select 0, %s4, %s2
  $region1: #{tpu_custom_call.1} parent=0
    #allocation2 [shape = 'u8[8192]{0}', space=vmem, size = 0x2000, scoped, tag = 'input window, operand 0, single buffered']
    #allocation3 [shape = 's32[1]{0}', space=sflag, size = 0x4, scoped, tag = 'scoped memory for tpu_custom_call.1']
    #allocation4 [shape = 's32[1]{0}', space=sflag, size = 0x4, scoped, tag = 'scoped memory for tpu_custom_call.1']
    #allocation5 [shape = 'u8[8192]{0}', space=vmem, size = 0x2000, scoped, tag = 'output window, operand 0, single buffered']
    %6 = vsyncpa [#allocation3], 0
    %7 = vsyncpa [#allocation4], 0
    // Predicated region
    $region2: #{tpu_custom_call.1} parent=1 // pred_check
      _
    $region3: #{tpu_custom_call.1} parent=1 // pred_check_branch
      %9 = sbr.rel (0) target = $region5
    $region4: #{tpu_custom_call.1} parent=1 // pred_region
      %s11 = ssub.s32 256, 256
      %12 = vsyncadd [#allocation3], %s11
      %s13 = sshll.u32 [#allocation2], 4
      %s14 = int_to_ptr.vmem [resolvable:$true] %s13
      %19 = dma.hbm_to_vmem [thread:$0]  %s0, 256, %s14, [#allocation3], 128, 128, 8
    $region5: #{tpu_custom_call.1} parent=1 // pred_fallthru
      _
    // Predicated region
    $region6: #{tpu_custom_call.1} parent=1 // pred_check
      _
    $region7: #{tpu_custom_call.1} parent=1 // pred_check_branch
      %21 = sbr.rel (0) target = $region9
    $region8: #{tpu_custom_call.1} parent=1 // pred_region
      %22 = dma.done [#allocation3], 256
    $region9: #{tpu_custom_call.1} parent=1 // pred_fallthru
      _
    %v23 = vld [vmem:[#allocation2] sm:$0xff]
    %v24 = vld [vmem:[#allocation2 + $0x8] sm:$0xff]
    %v25 = vround.ne.pseudo %v23
    %v26 = vround.ne.pseudo %v24
    %v27 = vmax.f32 %v25, 0.0
    %v28 = vmax.f32 %v26, 0.0
    %v29 = vmin.f32 %v27, 255.0
    %v30 = vmin.f32 %v28, 255.0
    %v31 = vadd.f32 %v29, 3.0
    %v32 = vadd.f32 %v30, 3.0
    %v33 = vmin.f32 %v31, 6.0
    %v34 = vmin.f32 %v32, 6.0
    %v35 = vmul.f32 %v29, %v33
    %v36 = vmul.f32 %v30, %v34
    %v37 = vmul.f32 %v35, 0.5555556
    %v38 = vmul.f32 %v36, 0.5555556
    %v39 = vround.ne.pseudo %v37
    %v40 = vround.ne.pseudo %v38
    %v41 = vmax.f32 %v39, -1.0
    %v42 = vmax.f32 %v40, -1.0
    %v43 = vmin.f32 %v41, 254.0
    %v44 = vmin.f32 %v42, 254.0
    %v45 = vmul.f32 %v43, 0.3
    %v46 = vmul.f32 %v44, 0.3
    %47 = vst [vmem:[#allocation5] sm:$0xff] %v45
    %48 = vst [vmem:[#allocation5 + $0x8] sm:$0xff] %v46
    // Predicated region
    $region10: #{tpu_custom_call.1} parent=1 // pred_check
      _
    $region11: #{tpu_custom_call.1} parent=1 // pred_check_branch
      %50 = sbr.rel (0) target = $region13
    $region12: #{tpu_custom_call.1} parent=1 // pred_region
      %s52 = ssub.s32 256, 256
      %53 = vsyncadd [#allocation4], %s52
      %s54 = sshll.u32 [#allocation5], 4
      %s55 = int_to_ptr.vmem [resolvable:$true] %s54
      %60 = dma.vmem_to_hbm [thread:$0]  %s55, 256, %s1, [#allocation4], 128, 128, 8
    $region13: #{tpu_custom_call.1} parent=1 // pred_fallthru
      _
    // Predicated region
    $region14: #{tpu_custom_call.1} parent=1 // pred_check
      _
    $region15: #{tpu_custom_call.1} parent=1 // pred_check_branch
      %62 = sbr.rel (0) target = $region17
    $region16: #{tpu_custom_call.1} parent=1 // pred_region
      %63 = dma.done [#allocation4], 256
    $region17: #{tpu_custom_call.1} parent=1 // pred_fallthru
      _
    %64 = vsyncpa [#allocation3], 1
    %65 = vsyncpa [#allocation4], 1

</llo_original>
